<compile_context>
chip_gen: v7x
topology: tpu7x:2x2x1
jax: 0.10.0
libtpu: 0.0.40
codegen_flags: <defaults>
</compile_context>

<pallas_src>
import functools

import numpy as np
import jax
import jax.numpy as jnp
from jax.experimental import pallas as pl
from jax.experimental.pallas import tpu as pltpu


def _residual_conv_block_kernel(x_ref, mask_ref, w_ref, b_ref, out_ref, *,
                                W, HW, n_per_step, use_residual):
    # x_ref   : (nb, C, HW)  batch slice, channels-first, flat spatial (lane-dense)
    # mask_ref: (9*C, HW)    f32 0/1 validity mask for the im2col slab
    # w_ref   : (2, C, 9*C)  packed conv weights, K order = (tap major, Cin minor)
    # b_ref   : (2, C, 1)    packed biases
    # out_ref : (nb, C, HW)
    mask = mask_ref[...]                                   # loaded once per step
    w1 = w_ref[0]
    w2 = w_ref[1]
    b1 = b_ref[0]
    b2 = b_ref[1]

    def conv3x3(v, w, b):
        # v: (C, HW) f32 -> (C, HW) f32 ('SAME' 3x3 conv, bias added).
        # Build the im2col slab with rolls (XLU) + one mask multiply (VPU);
        # the mask kills every cross-row / cross-image wrap, reproducing the
        # zero padding of the reference conv.
        taps = []
        for t in range(9):
            oi = t // 3 - 1
            oj = t % 3 - 1
            shift = (-(oi * W + oj)) % HW
            taps.append(v if shift == 0 else pltpu.roll(v, shift=shift, axis=1))
        slab = jnp.concatenate(taps, axis=0) * mask        # (9C, HW), vreg-resident
        return jnp.dot(w, slab, preferred_element_type=jnp.float32) + b

    for i in range(n_per_step):                            # small static unroll
        x = x_ref[i].astype(jnp.float32)                   # (C, HW)
        f1 = jnp.maximum(conv3x3(x, w1, b1), 0.0)          # conv_1 -> ReLU
        f2 = conv3x3(f1, w2, b2)                           # conv_2
        y = f2 + x if use_residual else f2                 # residual add
        out_ref[i] = jnp.maximum(y, 0.0).astype(out_ref.dtype)  # final ReLU


def residual_conv_block(x_nchw, w1, b1, w2, b2, *, use_residual=True):
    """Forward pass of ResidualConvBlock (act_name='relu').

    x_nchw : (N, C, H, W) float32   (PyTorch layout at the API boundary)
    w1, w2 : (3, 3, C, C) float32   (HWIO)
    b1, b2 : (C,)         float32
    returns: (N, C, H, W) float32
    """
    N, C, H, W = x_nchw.shape
    HW = H * W
    x_flat = x_nchw.reshape(N, C, HW)          # free reshape: no transpose/pad

    # --- grid-invariant inputs (built once, DMA'd once) ---------------------
    # Packed weights: (kh, kw, Cin, Cout) -> (Cout, 9*Cin), tap-major K.
    def pack_w(w):
        return jnp.transpose(w, (3, 0, 1, 2)).reshape(C, 9 * C)
    w_pk = jnp.stack([pack_w(w1), pack_w(w2)])                 # (2, C, 9C)
    b_pk = jnp.stack([b1.reshape(C, 1), b2.reshape(C, 1)])     # (2, C, 1)

    # im2col validity mask (compile-time constant, numpy -> zero runtime cost).
    lane = np.arange(HW)
    hh = lane // W
    ww = lane % W
    tap_masks = []
    for t in range(9):
        oi = t // 3 - 1
        oj = t % 3 - 1
        m = np.ones((HW,), dtype=bool)
        if oi == -1:
            m = m & (hh >= 1)
        if oi == 1:
            m = m & (hh <= H - 2)
        if oj == -1:
            m = m & (ww >= 1)
        if oj == 1:
            m = m & (ww <= W - 2)
        tap_masks.append(m)
    mask_np = np.broadcast_to(np.stack(tap_masks)[:, None, :], (9, C, HW))
    mask = jnp.asarray(mask_np.reshape(9 * C, HW).astype(np.float32))

    # --- grid: 2-way parallel split when possible (both v7x TCs busy); any
    # remaining batch is folded inside each step (amortizes ~0.35us/step on
    # single-core v5e/v6e). -------------------------------------------------
    num_steps = 2 if (N % 2 == 0 and N >= 2) else 1
    nb = N // num_steps

    kernel = functools.partial(_residual_conv_block_kernel, W=W, HW=HW,
                               n_per_step=nb, use_residual=use_residual)

    out_flat = pl.pallas_call(
        kernel,
        out_shape=jax.ShapeDtypeStruct((N, C, HW), x_nchw.dtype),
        grid_spec=pltpu.PrefetchScalarGridSpec(
            num_scalar_prefetch=0,
            grid=(num_steps,),
            in_specs=[
                pl.BlockSpec((nb, C, HW), lambda n: (n, 0, 0)),
                pl.BlockSpec((9 * C, HW), lambda n: (0, 0)),
                pl.BlockSpec((2, C, 9 * C), lambda n: (0, 0, 0)),
                pl.BlockSpec((2, C, 1), lambda n: (0, 0, 0)),
            ],
            out_specs=pl.BlockSpec((nb, C, HW), lambda n: (n, 0, 0)),
        ),
        compiler_params=pltpu.CompilerParams(
            dimension_semantics=("parallel",)),
    )(x_flat, mask, w_pk, b_pk)

    return out_flat.reshape(N, C, H, W)


def _reference_forward(x_nchw, w1, b1, w2, b2, *, use_residual=True):
    # Pure-JAX reference (lax conv) for correctness checking.
    x = jnp.transpose(x_nchw, (0, 2, 3, 1))
    dn = ('NHWC', 'HWIO', 'NHWC')
    f = jax.lax.conv_general_dilated(x, w1, (1, 1), 'SAME',
                                     dimension_numbers=dn) + b1
    f = jnp.maximum(f, 0.0)
    f = jax.lax.conv_general_dilated(f, w2, (1, 1), 'SAME',
                                     dimension_numbers=dn) + b2
    y = f + x if use_residual else f
    return jnp.transpose(jnp.maximum(y, 0.0), (0, 3, 1, 2))


def _init_conv_params(key, chs, ks):
    # Deterministic init mimicking PyTorch Conv2d defaults:
    # U(-1/sqrt(fan_in), 1/sqrt(fan_in)) for weight and bias, fan_in=chs*ks*ks.
    kw, kb = jax.random.split(key)
    fan_in = chs * ks * ks
    bound = 1.0 / (fan_in ** 0.5)
    w = jax.random.uniform(kw, (ks, ks, chs, chs), jnp.float32, -bound, bound)
    b = jax.random.uniform(kb, (chs,), jnp.float32, -bound, bound)
    return w, b


if __name__ == "__main__":
    key = jax.random.PRNGKey(0)
    k_x, k_c1, k_c2 = jax.random.split(key, 3)

    N, C, H, W = 2, 4, 16, 16   # small shapes consistent with the module
    ks = 3

    x = jax.random.normal(k_x, (N, C, H, W), jnp.float32)
    w1, b1 = _init_conv_params(k_c1, C, ks)
    w2, b2 = _init_conv_params(k_c2, C, ks)

    fwd = jax.jit(functools.partial(residual_conv_block, use_residual=True))
    out = jax.block_until_ready(fwd(x, w1, b1, w2, b2))

    ref = _reference_forward(x, w1, b1, w2, b2, use_residual=True)
    assert out.shape == (N, C, H, W)
    assert jnp.allclose(out, ref, atol=1e-4, rtol=1e-4), "mismatch vs reference"

    print("KERNEL_OK")
</pallas_src>

<mosaic_0001>
module attributes {stable_mosaic.version = 11 : i64} {
  func.func @_residual_conv_block_kernel(%arg0: i32, %arg1: memref<1x4x256xf32, #tpu.memory_space<vmem>>, %arg2: memref<36x256xf32, #tpu.memory_space<vmem>>, %arg3: memref<2x4x36xf32, #tpu.memory_space<vmem>>, %arg4: memref<2x4x1xf32, #tpu.memory_space<vmem>>, %arg5: memref<1x4x256xf32, #tpu.memory_space<vmem>>) attributes {dimension_semantics = [#tpu.dimension_semantics<parallel>], iteration_bounds = array<i64: 2>, scalar_prefetch = 0 : i64, scratch_operands = 0 : i64, tpu.core_type = #tpu.core_type<tc>, window_params = [{transform_indices = @transform_0, window_bounds = array<i64: 1, 4, 256>}, {pipeline_mode = #tpu.pipeline_mode<synchronous>, transform_indices = @transform_1, window_bounds = array<i64: 36, 256>}, {pipeline_mode = #tpu.pipeline_mode<synchronous>, transform_indices = @transform_2, window_bounds = array<i64: 2, 4, 36>}, {pipeline_mode = #tpu.pipeline_mode<synchronous>, transform_indices = @transform_3, window_bounds = array<i64: 2, 4, 1>}, {transform_indices = @transform_4, window_bounds = array<i64: 1, 4, 256>}]} {
    %c0 = arith.constant 0 : index
    %c0_0 = arith.constant 0 : index
    %0 = vector.load %arg2[%c0, %c0_0] : memref<36x256xf32, #tpu.memory_space<vmem>>, vector<36x256xf32>
    %c0_1 = arith.constant 0 : index
    %c0_2 = arith.constant 0 : index
    %c0_3 = arith.constant 0 : index
    %1 = vector.load %arg3[%c0_1, %c0_2, %c0_3] : memref<2x4x36xf32, #tpu.memory_space<vmem>>, vector<1x4x36xf32>
    %2 = vector.shape_cast %1 : vector<1x4x36xf32> to vector<4x36xf32>
    %c1 = arith.constant 1 : index
    %c0_4 = arith.constant 0 : index
    %c0_5 = arith.constant 0 : index
    %3 = vector.load %arg3[%c1, %c0_4, %c0_5] : memref<2x4x36xf32, #tpu.memory_space<vmem>>, vector<1x4x36xf32>
    %4 = vector.shape_cast %3 : vector<1x4x36xf32> to vector<4x36xf32>
    %c0_6 = arith.constant 0 : index
    %c0_7 = arith.constant 0 : index
    %c0_8 = arith.constant 0 : index
    %5 = vector.load %arg4[%c0_6, %c0_7, %c0_8] : memref<2x4x1xf32, #tpu.memory_space<vmem>>, vector<1x4x1xf32>
    %6 = vector.shape_cast %5 : vector<1x4x1xf32> to vector<4x1xf32>
    %c1_9 = arith.constant 1 : index
    %c0_10 = arith.constant 0 : index
    %c0_11 = arith.constant 0 : index
    %7 = vector.load %arg4[%c1_9, %c0_10, %c0_11] : memref<2x4x1xf32, #tpu.memory_space<vmem>>, vector<1x4x1xf32>
    %8 = vector.shape_cast %7 : vector<1x4x1xf32> to vector<4x1xf32>
    %c0_12 = arith.constant 0 : index
    %c0_13 = arith.constant 0 : index
    %c0_14 = arith.constant 0 : index
    %9 = vector.load %arg1[%c0_12, %c0_13, %c0_14] : memref<1x4x256xf32, #tpu.memory_space<vmem>>, vector<1x4x256xf32>
    %10 = vector.shape_cast %9 : vector<1x4x256xf32> to vector<4x256xf32>
    %c17_i32 = arith.constant 17 : i32
    %11 = tpu.dynamic_rotate %10 by %c17_i32 dim 1 : vector<4x256xf32>, i32 -> vector<4x256xf32>
    %c16_i32 = arith.constant 16 : i32
    %12 = tpu.dynamic_rotate %10 by %c16_i32 dim 1 : vector<4x256xf32>, i32 -> vector<4x256xf32>
    %c15_i32 = arith.constant 15 : i32
    %13 = tpu.dynamic_rotate %10 by %c15_i32 dim 1 : vector<4x256xf32>, i32 -> vector<4x256xf32>
    %c1_i32 = arith.constant 1 : i32
    %14 = tpu.dynamic_rotate %10 by %c1_i32 dim 1 : vector<4x256xf32>, i32 -> vector<4x256xf32>
    %c255_i32 = arith.constant 255 : i32
    %15 = tpu.dynamic_rotate %10 by %c255_i32 dim 1 : vector<4x256xf32>, i32 -> vector<4x256xf32>
    %c241_i32 = arith.constant 241 : i32
    %16 = tpu.dynamic_rotate %10 by %c241_i32 dim 1 : vector<4x256xf32>, i32 -> vector<4x256xf32>
    %c240_i32 = arith.constant 240 : i32
    %17 = tpu.dynamic_rotate %10 by %c240_i32 dim 1 : vector<4x256xf32>, i32 -> vector<4x256xf32>
    %c239_i32 = arith.constant 239 : i32
    %18 = tpu.dynamic_rotate %10 by %c239_i32 dim 1 : vector<4x256xf32>, i32 -> vector<4x256xf32>
    %19 = tpu.concatenate %11, %12, %13, %14, %10, %15, %16, %17, %18 in 0 : vector<4x256xf32>, vector<4x256xf32>, vector<4x256xf32>, vector<4x256xf32>, vector<4x256xf32>, vector<4x256xf32>, vector<4x256xf32>, vector<4x256xf32>, vector<4x256xf32> -> vector<36x256xf32>
    %20 = arith.mulf %19, %0 : vector<36x256xf32>
    %cst = arith.constant dense<0.000000e+00> : vector<4x256xf32>
    %21 = tpu.matmul %2, %20, %cst {dimension_numbers = #tpu.dot_dimension_numbers<[1], [0], [0], [1], [0, 0, 1, 1], [], []>} : vector<4x36xf32>, vector<36x256xf32>, vector<4x256xf32> -> vector<4x256xf32>
    %22 = vector.broadcast %6 : vector<4x1xf32> to vector<4x256xf32>
    %23 = arith.addf %21, %22 : vector<4x256xf32>
    %cst_15 = arith.constant 0.000000e+00 : f32
    %24 = vector.broadcast %cst_15 : f32 to vector<4x256xf32>
    %25 = arith.maximumf %23, %24 : vector<4x256xf32>
    %c17_i32_16 = arith.constant 17 : i32
    %26 = tpu.dynamic_rotate %25 by %c17_i32_16 dim 1 : vector<4x256xf32>, i32 -> vector<4x256xf32>
    %c16_i32_17 = arith.constant 16 : i32
    %27 = tpu.dynamic_rotate %25 by %c16_i32_17 dim 1 : vector<4x256xf32>, i32 -> vector<4x256xf32>
    %c15_i32_18 = arith.constant 15 : i32
    %28 = tpu.dynamic_rotate %25 by %c15_i32_18 dim 1 : vector<4x256xf32>, i32 -> vector<4x256xf32>
    %c1_i32_19 = arith.constant 1 : i32
    %29 = tpu.dynamic_rotate %25 by %c1_i32_19 dim 1 : vector<4x256xf32>, i32 -> vector<4x256xf32>
    %c255_i32_20 = arith.constant 255 : i32
    %30 = tpu.dynamic_rotate %25 by %c255_i32_20 dim 1 : vector<4x256xf32>, i32 -> vector<4x256xf32>
    %c241_i32_21 = arith.constant 241 : i32
    %31 = tpu.dynamic_rotate %25 by %c241_i32_21 dim 1 : vector<4x256xf32>, i32 -> vector<4x256xf32>
    %c240_i32_22 = arith.constant 240 : i32
    %32 = tpu.dynamic_rotate %25 by %c240_i32_22 dim 1 : vector<4x256xf32>, i32 -> vector<4x256xf32>
    %c239_i32_23 = arith.constant 239 : i32
    %33 = tpu.dynamic_rotate %25 by %c239_i32_23 dim 1 : vector<4x256xf32>, i32 -> vector<4x256xf32>
    %34 = tpu.concatenate %26, %27, %28, %29, %25, %30, %31, %32, %33 in 0 : vector<4x256xf32>, vector<4x256xf32>, vector<4x256xf32>, vector<4x256xf32>, vector<4x256xf32>, vector<4x256xf32>, vector<4x256xf32>, vector<4x256xf32>, vector<4x256xf32> -> vector<36x256xf32>
    %35 = arith.mulf %34, %0 : vector<36x256xf32>
    %cst_24 = arith.constant dense<0.000000e+00> : vector<4x256xf32>
    %36 = tpu.matmul %4, %35, %cst_24 {dimension_numbers = #tpu.dot_dimension_numbers<[1], [0], [0], [1], [0, 0, 1, 1], [], []>} : vector<4x36xf32>, vector<36x256xf32>, vector<4x256xf32> -> vector<4x256xf32>
    %37 = vector.broadcast %8 : vector<4x1xf32> to vector<4x256xf32>
    %38 = arith.addf %36, %37 : vector<4x256xf32>
    %39 = arith.addf %38, %10 : vector<4x256xf32>
    %cst_25 = arith.constant 0.000000e+00 : f32
    %40 = vector.broadcast %cst_25 : f32 to vector<4x256xf32>
    %41 = arith.maximumf %39, %40 : vector<4x256xf32>
    %c0_26 = arith.constant 0 : index
    %c0_27 = arith.constant 0 : index
    %c0_28 = arith.constant 0 : index
    %42 = vector.load %arg5[%c0_26, %c0_27, %c0_28] : memref<1x4x256xf32, #tpu.memory_space<vmem>>, vector<1x4x256xf32>
    %43 = vector.shape_cast %42 : vector<1x4x256xf32> to vector<4x256xf32>
    %44 = vector.shape_cast %41 : vector<4x256xf32> to vector<1x4x256xf32>
    tpu.vector_store %arg5[%c0_26, %c0_27, %c0_28], %44 {strides = array<i32>} : memref<1x4x256xf32, #tpu.memory_space<vmem>>, vector<1x4x256xf32>,
    return
  }
  func.func @transform_0(%arg0: i32) -> (i32, i32, i32) {
    %c0_i32 = arith.constant 0 : i32
    %c0_i32_0 = arith.constant 0 : i32
    %c0_i32_1 = arith.constant 0 : i32
    return %arg0, %c0_i32, %c0_i32_0 : i32, i32, i32
  }
  func.func @transform_1(%arg0: i32) -> (i32, i32) {
    %c0_i32 = arith.constant 0 : i32
    %c0_i32_0 = arith.constant 0 : i32
    %c0_i32_1 = arith.constant 0 : i32
    return %c0_i32, %c0_i32_0 : i32, i32
  }
  func.func @transform_2(%arg0: i32) -> (i32, i32, i32) {
    %c0_i32 = arith.constant 0 : i32
    %c0_i32_0 = arith.constant 0 : i32
    %c0_i32_1 = arith.constant 0 : i32
    %c0_i32_2 = arith.constant 0 : i32
    return %c0_i32, %c0_i32_0, %c0_i32_1 : i32, i32, i32
  }
  func.func @transform_3(%arg0: i32) -> (i32, i32, i32) {
    %c0_i32 = arith.constant 0 : i32
    %c0_i32_0 = arith.constant 0 : i32
    %c0_i32_1 = arith.constant 0 : i32
    %c0_i32_2 = arith.constant 0 : i32
    return %c0_i32, %c0_i32_0, %c0_i32_1 : i32, i32, i32
  }
  func.func @transform_4(%arg0: i32) -> (i32, i32, i32) {
    %c0_i32 = arith.constant 0 : i32
    %c0_i32_0 = arith.constant 0 : i32
    %c0_i32_1 = arith.constant 0 : i32
    return %arg0, %c0_i32, %c0_i32_0 : i32, i32, i32
  }
}

</mosaic_0001>

<llo_original>
// kernel: residual_conv_block.1
$region0: #{residual_conv_block.1}
  #allocation0 [shape = 'u32[]', space=smem, size = 0x4, offset = 0x4, fixed_abs, tag = 'smem constant byte address 0x4 - core index']
  #allocation1 [shape = 'u32[144,128]{1,0:T(1,128)}', space=vmem, size = 0x12000, scoped, tag = 'internal scratch']
  %s0 = inlined_call_operand.vmem [shape: f32[2,4,256], index: 0, kind: input, shape index: {}]
  %s1 = inlined_call_operand.vmem [shape: f32[36,256], index: 1, kind: input, shape index: {}]
  %s2 = inlined_call_operand.vmem [shape: f32[2,4,36], index: 2, kind: input, shape index: {}]
  %s3 = inlined_call_operand.vmem [shape: f32[2,4,1], index: 3, kind: input, shape index: {}]
  %s4 = inlined_call_operand.vmem [shape: f32[2,4,256], index: 4, kind: output, shape index: {}]
  %s5 = sld [smem:[#allocation0]]
  $region49: #{residual_conv_block.1} parent=0
    _
  %s7 = ssub.s32 1, %s5
  %s8 = scalar_select 0, %s7, %s5
  loop: start=0, step=1, limit=4
  $region2: #{residual_conv_block.1} parent=0 // loop_pre_header
    _
  $region3: #{residual_conv_block.1} parent=0 // loop_header
    %s10 = sphi 0, %s14
    %p11 = scmp.ge.s32.totalorder %s10, 4
    %s20 = sphi 0, %s22
    %s23 = sphi 0, %s20
    %s24 = sphi 0, %s23
    %s40 = sphi 0, %s24
    %s44 = sphi 0, %s44
    %s46 = sphi 0, %s44
    %s47 = sphi 0, %s46
    %s61 = sphi 0, %s47
    %s65 = sphi 0, %s65
    %s67 = sphi 0, %s65
    %s68 = sphi 0, %s67
    %s82 = sphi 0, %s68
    %s86 = sphi 0, %s86
    %s88 = sphi 0, %s86
    %s89 = sphi 0, %s88
    %s103 = sphi 0, %s89
    %s109 = sphi 0, %s111
    %s112 = sphi 0, %s109
    %s113 = sphi 0, %s112
    %s129 = sphi 0, %s113
  $region4: #{residual_conv_block.1} parent=0 // loop_header_branch
    %13 = sbr.rel (%p11) target = $region8
  $region5: #{residual_conv_block.1} parent=0 // loop_body
    %s15 = ssub.s32 %s10, 1
    %s16 = ssub.s32 %s10, 2
    %s17 = sadd.s32 %s10, 1
    %s18 = ssub.s32 %s10, %s17
    %p19 = scmp.eq.s32.totalorder %s18, 0
    %s21 = sadd.s32 %s20, 1
    %s22 = scalar_select %p19, %s20, %s21
    %p25 = pneg %p19
    %p26 = scmp.eq.s32.totalorder %s10, 1
    %p27 = por %p25, %p26
    %p28 = scmp.ne.s32.totalorder %s20, %s23
    %p29 = scmp.eq.s32.totalorder %s10, 0
    %p30 = por %p28, %p29
    %p31 = scmp.ne.s32.totalorder %s20, %s23
    %p32 = scmp.eq.s32.totalorder %s15, 1
    %p33 = por %p31, %p32
    %p34 = scmp.ne.s32.totalorder %s23, %s24
    %p35 = scmp.eq.s32.totalorder %s15, 0
    %p36 = por %p34, %p35
    %p37 = scmp.ne.s32.totalorder %s23, %s24
    %p38 = scmp.eq.s32.totalorder %s16, 1
    %p39 = por %p37, %p38
    %p41 = scmp.ne.s32.totalorder %s24, %s40
    %p42 = scmp.eq.s32.totalorder %s16, 0
    %p43 = por %p41, %p42
    %s45 = sadd.s32 %s44, 1
    %p48 = scmp.eq.s32.totalorder %s10, 1
    %p49 = scmp.ne.s32.totalorder %s44, %s46
    %p50 = scmp.eq.s32.totalorder %s10, 0
    %p51 = por %p49, %p50
    %p52 = scmp.ne.s32.totalorder %s44, %s46
    %p53 = scmp.eq.s32.totalorder %s15, 1
    %p54 = por %p52, %p53
    %p55 = scmp.ne.s32.totalorder %s46, %s47
    %p56 = scmp.eq.s32.totalorder %s15, 0
    %p57 = por %p55, %p56
    %p58 = scmp.ne.s32.totalorder %s46, %s47
    %p59 = scmp.eq.s32.totalorder %s16, 1
    %p60 = por %p58, %p59
    %p62 = scmp.ne.s32.totalorder %s47, %s61
    %p63 = scmp.eq.s32.totalorder %s16, 0
    %p64 = por %p62, %p63
    %s66 = sadd.s32 %s65, 1
    %p69 = scmp.eq.s32.totalorder %s10, 1
    %p70 = scmp.ne.s32.totalorder %s65, %s67
    %p71 = scmp.eq.s32.totalorder %s10, 0
    %p72 = por %p70, %p71
    %p73 = scmp.ne.s32.totalorder %s65, %s67
    %p74 = scmp.eq.s32.totalorder %s15, 1
    %p75 = por %p73, %p74
    %p76 = scmp.ne.s32.totalorder %s67, %s68
    %p77 = scmp.eq.s32.totalorder %s15, 0
    %p78 = por %p76, %p77
    %p79 = scmp.ne.s32.totalorder %s67, %s68
    %p80 = scmp.eq.s32.totalorder %s16, 1
    %p81 = por %p79, %p80
    %p83 = scmp.ne.s32.totalorder %s68, %s82
    %p84 = scmp.eq.s32.totalorder %s16, 0
    %p85 = por %p83, %p84
    %s87 = sadd.s32 %s86, 1
    %p90 = scmp.eq.s32.totalorder %s10, 1
    %p91 = scmp.ne.s32.totalorder %s86, %s88
    %p92 = scmp.eq.s32.totalorder %s10, 0
    %p93 = por %p91, %p92
    %p94 = scmp.ne.s32.totalorder %s86, %s88
    %p95 = scmp.eq.s32.totalorder %s15, 1
    %p96 = por %p94, %p95
    %p97 = scmp.ne.s32.totalorder %s88, %s89
    %p98 = scmp.eq.s32.totalorder %s15, 0
    %p99 = por %p97, %p98
    %p100 = scmp.ne.s32.totalorder %s88, %s89
    %p101 = scmp.eq.s32.totalorder %s16, 1
    %p102 = por %p100, %p101
    %p104 = scmp.ne.s32.totalorder %s89, %s103
    %p105 = scmp.eq.s32.totalorder %s16, 0
    %p106 = por %p104, %p105
    %s107 = ssub.s32 %s10, %s17
    %p108 = scmp.eq.s32.totalorder %s107, 0
    %s110 = sadd.s32 %s109, 1
    %s111 = scalar_select %p108, %s109, %s110
    %p114 = pneg %p108
    %p115 = scmp.eq.s32.totalorder %s10, 1
    %p116 = por %p114, %p115
    %p117 = scmp.ne.s32.totalorder %s109, %s112
    %p118 = scmp.eq.s32.totalorder %s10, 0
    %p119 = por %p117, %p118
    %p120 = scmp.ne.s32.totalorder %s109, %s112
    %p121 = scmp.eq.s32.totalorder %s15, 1
    %p122 = por %p120, %p121
    %p123 = scmp.ne.s32.totalorder %s112, %s113
    %p124 = scmp.eq.s32.totalorder %s15, 0
    %p125 = por %p123, %p124
    %p126 = scmp.ne.s32.totalorder %s112, %s113
    %p127 = scmp.eq.s32.totalorder %s16, 1
    %p128 = por %p126, %p127
    %p130 = scmp.ne.s32.totalorder %s113, %s129
    %p131 = scmp.eq.s32.totalorder %s16, 0
    %p132 = por %p130, %p131
    %p133 = scmp.le.s32.totalorder 1, %s10
    %p134 = scmp.lt.s32.totalorder %s10, 3
    %p135 = pnand %p133, %p134
    %p136 = pneg %p135
    // Predicated region
    $region9: #{residual_conv_block.1} parent=5 // pred_check
      _
    $region10: #{residual_conv_block.1} parent=5 // pred_check_branch
      %138 = sbr.rel (%p135) target = $region12
    $region11: #{residual_conv_block.1} parent=5 // pred_region
      %s139 = ssub.s32 %s10, 1
      // Predicated region
      $region13: #{residual_conv_block.1} parent=11 // pred_check
        %p140 = pneg %p57
      $region14: #{residual_conv_block.1} parent=11 // pred_check_branch
        %142 = sbr.rel (%p140) target = $region16
      $region15: #{residual_conv_block.1} parent=11 // pred_region
        _
      $region16: #{residual_conv_block.1} parent=11 // pred_fallthru
        _
      // Predicated region
      $region17: #{residual_conv_block.1} parent=11 // pred_check
        %p143 = pneg %p78
      $region18: #{residual_conv_block.1} parent=11 // pred_check_branch
        %145 = sbr.rel (%p143) target = $region20
      $region19: #{residual_conv_block.1} parent=11 // pred_region
        _
      $region20: #{residual_conv_block.1} parent=11 // pred_fallthru
        _
      // Predicated region
      $region21: #{residual_conv_block.1} parent=11 // pred_check
        %p146 = pneg %p99
      $region22: #{residual_conv_block.1} parent=11 // pred_check_branch
        %148 = sbr.rel (%p146) target = $region24
      $region23: #{residual_conv_block.1} parent=11 // pred_region
        _
      $region24: #{residual_conv_block.1} parent=11 // pred_fallthru
        _
    $region12: #{residual_conv_block.1} parent=5 // pred_fallthru
      _
    %p149 = scmp.lt.s32.totalorder %s10, 2
    // Predicated region
    $region25: #{residual_conv_block.1} parent=5 // pred_check
      %p150 = pneg %p149
    $region26: #{residual_conv_block.1} parent=5 // pred_check_branch
      %152 = sbr.rel (%p150) target = $region28
    $region27: #{residual_conv_block.1} parent=5 // pred_region
      // Predicated region
      $region29: #{residual_conv_block.1} parent=27 // pred_check
        %p153 = pneg %p30
      $region30: #{residual_conv_block.1} parent=27 // pred_check_branch
        %155 = sbr.rel (%p153) target = $region32
      $region31: #{residual_conv_block.1} parent=27 // pred_region
        %p156 = scmp.lt.s32.totalorder %s10, 1
        %s157 = scalar_select %p156, %s10, 1
        %s158 = smul.addr %s157, 2
        %s159 = smul.addr %s158, 4
        %s160 = scalar_lea.vmem %s0, %s159
      $region32: #{residual_conv_block.1} parent=27 // pred_fallthru
        _
    $region28: #{residual_conv_block.1} parent=5 // pred_fallthru
      _
    %p161 = scmp.le.s32.totalorder 1, %s10
    %p162 = scmp.lt.s32.totalorder %s10, 3
    %p163 = pnand %p161, %p162
    %p164 = pneg %p163
    // Predicated region
    $region33: #{residual_conv_block.1} parent=5 // pred_check
      _
    $region34: #{residual_conv_block.1} parent=5 // pred_check_branch
      %166 = sbr.rel (%p163) target = $region36
    $region35: #{residual_conv_block.1} parent=5 // pred_region
      %s167 = ssub.s32 %s10, 1
      %p168 = scmp.lt.s32.totalorder %s15, 1
      %s169 = scalar_select %p168, %s15, 1
      %s170 = smul.addr %s169, 2
      %s171 = smul.addr %s170, 4
      %s172 = scalar_lea.vmem %s0, %s171
      %p173 = pneg %p36
      %p174 = pneg %p33
      %p175 = pneg %p57
      %p176 = pneg %p54
      %p177 = pneg %p78
      %p178 = pneg %p75
      %p179 = pneg %p99
      %p180 = pneg %p96
      %p181 = pneg %p125
      %p182 = pneg %p122
      %p183 = scmp.lt.s32.totalorder %s15, 1
      %s184 = scalar_select %p183, %s15, 1
      %s185 = smul.addr %s184, 2
      %s186 = smul.addr %s185, 4
      %s187 = scalar_lea.vmem %s4, %s186
      %p188 = scmp.lt.s32.totalorder %s15, 1
      %s189 = scalar_select %p188, %s15, 1
      %s190 = smul.addr %s189, 2
      %s191 = smul.addr %s190, 4
      %s192 = scalar_lea.vmem %s0, %s191
      %p193 = scmp.lt.s32.totalorder %s15, 1
      %s194 = scalar_select %p193, %s15, 1
      %s195 = smul.addr %s194, 2
      %s196 = smul.addr %s195, 4
      %s197 = scalar_lea.vmem %s4, %s196
      %v198 = vld [vmem:[%s1] sm:$0xff]
      %v199 = vld [vmem:[%s1 + $0x8] sm:$0xff]
      %v200 = vld [vmem:[%s1 + $0x10] sm:$0xff]
      %v201 = vld [vmem:[%s1 + $0x18] sm:$0xff]
      %v202 = vld [vmem:[%s1 + $0x20] sm:$0xff]
      %v203 = vld [vmem:[%s1 + $0x28] sm:$0xff]
      %v204 = vld [vmem:[%s1 + $0x30] sm:$0xff]
      %v205 = vld [vmem:[%s1 + $0x38] sm:$0xff]
      %v206 = vld [vmem:[%s1 + $0x40] sm:$0xf]
      %v207 = vld [vmem:[%s1 + $0x48] sm:$0xf]
      %v208 = vld [vmem:[%s2] sm:$0xf]
      %s209 = scalar_lea.vmem %s2, 4
      %v210 = vld [vmem:[%s209] sm:$0xf]
      %v211 = vld [vmem:[%s3] sm:$0xf]
      %s212 = scalar_lea.vmem %s3, 4
      %v213 = vld [vmem:[%s212] sm:$0xf]
      %v214 = vld [vmem:[%s192] sm:$0xff]
      %v216 = vcombine.high %v214, %v214
      %218 = vrot.lane.b32.xlu0 %v214, 17
      %v219 = vpop.permute.xlu0 %218
      %220 = vrot.lane.b32.xlu0 %v216, 17
      %v221 = vpop.permute.xlu0 %220
      %v222 = vlaneseq
      %v223 = vand.u32 %v222, 127
      %vm224 = vcmp.lt.s32.totalorder %v223, 17
      %v225 = vsel %vm224, %v219, %v221
      %v226 = vsel %vm224, %v221, %v219
      %227 = vrot.lane.b32.xlu0 %v214, 16
      %v228 = vpop.permute.xlu0 %227
      %229 = vrot.lane.b32.xlu0 %v216, 16
      %v230 = vpop.permute.xlu0 %229
      %vm231 = vcmp.lt.s32.totalorder %v223, 16
      %v232 = vsel %vm231, %v228, %v230
      %v233 = vsel %vm231, %v230, %v228
      %234 = vrot.lane.b32.xlu0 %v214, 15
      %v235 = vpop.permute.xlu0 %234
      %236 = vrot.lane.b32.xlu0 %v216, 15
      %v237 = vpop.permute.xlu0 %236
      %vm238 = vcmp.lt.s32.totalorder %v223, 15
      %v239 = vsel %vm238, %v235, %v237
      %v240 = vsel %vm238, %v237, %v235
      %241 = vrot.lane.b32.xlu0 %v214, 1
      %v242 = vpop.permute.xlu0 %241
      %243 = vrot.lane.b32.xlu0 %v216, 1
      %v244 = vpop.permute.xlu0 %243
      %vm245 = vcmp.lt.s32.totalorder %v223, 1
      %v246 = vsel %vm245, %v242, %v244
      %v247 = vsel %vm245, %v244, %v242
      %248 = vrot.lane.b32.xlu0 %v214, 127
      %v249 = vpop.permute.xlu0 %248
      %250 = vrot.lane.b32.xlu0 %v216, 127
      %v251 = vpop.permute.xlu0 %250
      %vm252 = vcmp.lt.s32.totalorder %v223, 127
      %v253 = vsel %vm252, %v249, %v251
      %v254 = vsel %vm252, %v251, %v249
      %255 = vrot.lane.b32.xlu0 %v214, 113
      %v256 = vpop.permute.xlu0 %255
      %257 = vrot.lane.b32.xlu0 %v216, 113
      %v258 = vpop.permute.xlu0 %257
      %vm259 = vcmp.lt.s32.totalorder %v223, 113
      %v260 = vsel %vm259, %v256, %v258
      %v261 = vsel %vm259, %v258, %v256
      %262 = vrot.lane.b32.xlu0 %v214, 112
      %v263 = vpop.permute.xlu0 %262
      %264 = vrot.lane.b32.xlu0 %v216, 112
      %v265 = vpop.permute.xlu0 %264
      %vm266 = vcmp.lt.s32.totalorder %v223, 112
      %v267 = vsel %vm266, %v263, %v265
      %v268 = vsel %vm266, %v265, %v263
      %269 = vrot.lane.b32.xlu0 %v214, 111
      %v270 = vpop.permute.xlu0 %269
      %271 = vrot.lane.b32.xlu0 %v216, 111
      %v272 = vpop.permute.xlu0 %271
      %vm273 = vcmp.lt.s32.totalorder %v223, 111
      %v274 = vsel %vm273, %v270, %v272
      %v275 = vsel %vm273, %v272, %v270
      %v278 = vrot.slane %v233, 4
      %v279 = vrot.slane %v232, 4
      %v284 = vrot.slane %v247, 4
      %v285 = vrot.slane %v246, 4
      %v290 = vrot.slane %v253, 4
      %v291 = vrot.slane %v254, 4
      %v296 = vrot.slane %v267, 4
      %v297 = vrot.slane %v268, 4
      %vm300 = vcmask 1043456
      %v301 = vsel %vm300, %v226, %v278
      %v302 = vsel %vm300, %v225, %v279
      %v303 = vsel %vm300, %v240, %v284
      %v304 = vsel %vm300, %v239, %v285
      %v305 = vsel %vm300, %v214, %v290
      %v306 = vsel %vm300, %v216, %v291
      %v307 = vsel %vm300, %v260, %v296
      %v308 = vsel %vm300, %v261, %v297
      %v309 = vmul.f32 %v301, %v198
      %v310 = vmul.f32 %v302, %v199
      %v311 = vmul.f32 %v303, %v200
      %v312 = vmul.f32 %v304, %v201
      %v313 = vmul.f32 %v305, %v202
      %v314 = vmul.f32 %v306, %v203
      %v315 = vmul.f32 %v307, %v204
      %v316 = vmul.f32 %v308, %v205
      %v317 = vmul.f32 %v274, %v206
      %v318 = vmul.f32 %v275, %v207
      %320 = vset.pattern.permute.xlu0 0
      %321 = vperm.xlu0 %320, %v211
      %v322 = vpop.permute.xlu0 %321
      %vm324 = vcmask 293888
      %v326 = vsel %vm324, %v208, 0
      %v329 = vsel %vm300, %v317, 0
      %v332 = vsel %vm300, %v318, 0
      %334 = vmatprep.subr.mxu0 %v310
      %335 = vmatpush1.msra.mxu0 %v309
      %336 = vmatprep.subr.mxu0 %v312
      %337 = vmatpush1.msra.mxu0 %v311
      %338 = vmatprep.subr.mxu0 %v314
      %339 = vmatpush1.msra.mxu0 %v313
      %340 = vmatprep.subr.mxu0 %v316
      %341 = vmatpush1.msra.mxu0 %v315
      %342 = vmatprep.subr.mxu0 %v332
      %343 = vmatpush1.msra.mxu0 %v329
      %344 = vmatprep.subr.mxu0 0.0
      %345 = vmatpush1.msra.mxu0 0.0
      %346 = vmatprep.subr.mxu0 0.0
      %347 = vmatpush1.msra.mxu0 0.0
      %348 = vmatprep.subr.mxu0 0.0
      %349 = vmatpush1.msra.mxu0 0.0
      %350 = vmatprep.subr.mxu0 0.0
      %351 = vmatpush1.msra.mxu0 0.0
      %352 = vmatprep.subr.mxu0 0.0
      %353 = vmatpush1.msra.mxu0 0.0
      %354 = vmatprep.subr.mxu0 0.0
      %355 = vmatpush1.msra.mxu0 0.0
      %356 = vmatprep.subr.mxu0 0.0
      %357 = vmatpush1.msra.mxu0 0.0
      %358 = vmatprep.subr.mxu0 0.0
      %359 = vmatpush1.msra.mxu0 0.0
      %360 = vmatprep.subr.mxu0 0.0
      %361 = vmatpush1.msra.mxu0 0.0
      %362 = vmatprep.subr.mxu0 0.0
      %363 = vmatpush1.msra.mxu0 0.0
      %364 = vmatprep.subr.mxu0 0.0
      %365 = vmatpush1.msra.mxu0 0.0
      %366 = vmatprep.subr.mxu0 0.0
      %367 = vmatpush1.msra.mxu0 0.0
      %368 = vmatprep.subr.mxu0 0.0
      %369 = vmatpush1.msra.mxu0 0.0
      %370 = vmatprep.subr.mxu0 0.0
      %371 = vmatpush1.msra.mxu0 0.0
      %372 = vmatprep.subr.mxu0 0.0
      %373 = vmatpush1.msra.mxu0 0.0
      %374 = vmatprep.subr.mxu0 0.0
      %375 = vmatpush1.msra.mxu0 0.0
      %376 = vmatprep.subr.mxu0 0.0
      %377 = vmatpush1.msra.mxu0 0.0
      %378 = vmatprep.subr.mxu0 0.0
      %379 = vmatpush1.msra.mxu0 0.0
      %380 = vmatprep.subr.mxu0 0.0
      %381 = vmatpush1.msra.mxu0 0.0
      %382 = vmatprep.subr.mxu0 0.0
      %383 = vmatpush1.msra.mxu0 0.0
      %384 = vmatprep.subr.mxu0 0.0
      %385 = vmatpush1.msra.mxu0 0.0
      %386 = vmatprep.subr.mxu0 0.0
      %387 = vmatpush1.msra.mxu0 0.0
      %388 = vmatprep.subr.mxu0 0.0
      %389 = vmatpush1.msra.mxu0 0.0
      %390 = vmatprep.subr.mxu0 0.0
      %391 = vmatpush1.msra.mxu0 0.0
      %392 = vmatprep.subr.mxu0 0.0
      %393 = vmatpush1.msra.mxu0 0.0
      %394 = vmatprep.subr.mxu0 0.0
      %395 = vmatpush1.msra.mxu0 0.0
      %396 = vmatprep.subr.mxu0 0.0
      %397 = vmatpush1.msra.mxu0 0.0
      %398 = vmatprep.mubr.f32.mxu0 0.0
      %399 = vmatmul.mubr.f32.gmra.mrb[0].mxu0 %v326
      %v400 = vpop.f32.mrb[0].mxu0
      %v401 = vadd.f32 %v322, %v400
      %v402 = vpop.f32.mrb[0].mxu0
      %v403 = vadd.f32 %v322, %v402
      %404 = vdwg.mxu0
      %v405 = vmax.f32 %v401, 0.0
      %v406 = vmax.f32 %v403, 0.0
      %407 = vrot.lane.b32.xlu0 %v405, 17
      %v408 = vpop.permute.xlu0 %407
      %409 = vrot.lane.b32.xlu0 %v406, 17
      %v410 = vpop.permute.xlu0 %409
      %v411 = vsel %vm224, %v408, %v410
      %v412 = vsel %vm224, %v410, %v408
      %413 = vrot.lane.b32.xlu0 %v405, 16
      %v414 = vpop.permute.xlu0 %413
      %415 = vrot.lane.b32.xlu0 %v406, 16
      %v416 = vpop.permute.xlu0 %415
      %v417 = vsel %vm231, %v414, %v416
      %v418 = vsel %vm231, %v416, %v414
      %419 = vrot.lane.b32.xlu0 %v405, 15
      %v420 = vpop.permute.xlu0 %419
      %421 = vrot.lane.b32.xlu0 %v406, 15
      %v422 = vpop.permute.xlu0 %421
      %v423 = vsel %vm238, %v420, %v422
      %v424 = vsel %vm238, %v422, %v420
      %425 = vrot.lane.b32.xlu0 %v405, 1
      %v426 = vpop.permute.xlu0 %425
      %427 = vrot.lane.b32.xlu0 %v406, 1
      %v428 = vpop.permute.xlu0 %427
      %v429 = vsel %vm245, %v426, %v428
      %v430 = vsel %vm245, %v428, %v426
      %431 = vrot.lane.b32.xlu0 %v405, 127
      %v432 = vpop.permute.xlu0 %431
      %433 = vrot.lane.b32.xlu0 %v406, 127
      %v434 = vpop.permute.xlu0 %433
      %v435 = vsel %vm252, %v432, %v434
      %v436 = vsel %vm252, %v434, %v432
      %437 = vrot.lane.b32.xlu0 %v405, 113
      %v438 = vpop.permute.xlu0 %437
      %439 = vrot.lane.b32.xlu0 %v406, 113
      %v440 = vpop.permute.xlu0 %439
      %v441 = vsel %vm259, %v438, %v440
      %v442 = vsel %vm259, %v440, %v438
      %443 = vrot.lane.b32.xlu0 %v405, 112
      %v444 = vpop.permute.xlu0 %443
      %445 = vrot.lane.b32.xlu0 %v406, 112
      %v446 = vpop.permute.xlu0 %445
      %v447 = vsel %vm266, %v444, %v446
      %v448 = vsel %vm266, %v446, %v444
      %449 = vrot.lane.b32.xlu0 %v405, 111
      %v450 = vpop.permute.xlu0 %449
      %451 = vrot.lane.b32.xlu0 %v406, 111
      %v452 = vpop.permute.xlu0 %451
      %v453 = vsel %vm273, %v450, %v452
      %v454 = vsel %vm273, %v452, %v450
      %v457 = vrot.slane %v418, 4
      %v458 = vrot.slane %v417, 4
      %v463 = vrot.slane %v430, 4
      %v464 = vrot.slane %v429, 4
      %v469 = vrot.slane %v435, 4
      %v470 = vrot.slane %v436, 4
      %v475 = vrot.slane %v447, 4
      %v476 = vrot.slane %v448, 4
      %v479 = vsel %vm300, %v412, %v457
      %v480 = vsel %vm300, %v411, %v458
      %v481 = vsel %vm300, %v424, %v463
      %v482 = vsel %vm300, %v423, %v464
      %v483 = vsel %vm300, %v405, %v469
      %v484 = vsel %vm300, %v406, %v470
      %v485 = vsel %vm300, %v441, %v475
      %v486 = vsel %vm300, %v442, %v476
      %v487 = vmul.f32 %v479, %v198
      %v488 = vmul.f32 %v480, %v199
      %v489 = vmul.f32 %v481, %v200
      %v490 = vmul.f32 %v482, %v201
      %v491 = vmul.f32 %v483, %v202
      %v492 = vmul.f32 %v484, %v203
      %v493 = vmul.f32 %v485, %v204
      %v494 = vmul.f32 %v486, %v205
      %v495 = vmul.f32 %v453, %v206
      %v496 = vmul.f32 %v454, %v207
      %498 = vset.pattern.permute.xlu0 0
      %499 = vperm.xlu0 %498, %v213
      %v500 = vpop.permute.xlu0 %499
      %v503 = vsel %vm324, %v210, 0
      %v506 = vsel %vm300, %v495, 0
      %v509 = vsel %vm300, %v496, 0
      %511 = vmatprep.subr.mxu0 %v488
      %512 = vmatpush1.msra.mxu0 %v487
      %513 = vmatprep.subr.mxu0 %v490
      %514 = vmatpush1.msra.mxu0 %v489
      %515 = vmatprep.subr.mxu0 %v492
      %516 = vmatpush1.msra.mxu0 %v491
      %517 = vmatprep.subr.mxu0 %v494
      %518 = vmatpush1.msra.mxu0 %v493
      %519 = vmatprep.subr.mxu0 %v509
      %520 = vmatpush1.msra.mxu0 %v506
      %521 = vmatprep.subr.mxu0 0.0
      %522 = vmatpush1.msra.mxu0 0.0
      %523 = vmatprep.subr.mxu0 0.0
      %524 = vmatpush1.msra.mxu0 0.0
      %525 = vmatprep.subr.mxu0 0.0
      %526 = vmatpush1.msra.mxu0 0.0
      %527 = vmatprep.subr.mxu0 0.0
      %528 = vmatpush1.msra.mxu0 0.0
      %529 = vmatprep.subr.mxu0 0.0
      %530 = vmatpush1.msra.mxu0 0.0
      %531 = vmatprep.subr.mxu0 0.0
      %532 = vmatpush1.msra.mxu0 0.0
      %533 = vmatprep.subr.mxu0 0.0
      %534 = vmatpush1.msra.mxu0 0.0
      %535 = vmatprep.subr.mxu0 0.0
      %536 = vmatpush1.msra.mxu0 0.0
      %537 = vmatprep.subr.mxu0 0.0
      %538 = vmatpush1.msra.mxu0 0.0
      %539 = vmatprep.subr.mxu0 0.0
      %540 = vmatpush1.msra.mxu0 0.0
      %541 = vmatprep.subr.mxu0 0.0
      %542 = vmatpush1.msra.mxu0 0.0
      %543 = vmatprep.subr.mxu0 0.0
      %544 = vmatpush1.msra.mxu0 0.0
      %545 = vmatprep.subr.mxu0 0.0
      %546 = vmatpush1.msra.mxu0 0.0
      %547 = vmatprep.subr.mxu0 0.0
      %548 = vmatpush1.msra.mxu0 0.0
      %549 = vmatprep.subr.mxu0 0.0
      %550 = vmatpush1.msra.mxu0 0.0
      %551 = vmatprep.subr.mxu0 0.0
      %552 = vmatpush1.msra.mxu0 0.0
      %553 = vmatprep.subr.mxu0 0.0
      %554 = vmatpush1.msra.mxu0 0.0
      %555 = vmatprep.subr.mxu0 0.0
      %556 = vmatpush1.msra.mxu0 0.0
      %557 = vmatprep.subr.mxu0 0.0
      %558 = vmatpush1.msra.mxu0 0.0
      %559 = vmatprep.subr.mxu0 0.0
      %560 = vmatpush1.msra.mxu0 0.0
      %561 = vmatprep.subr.mxu0 0.0
      %562 = vmatpush1.msra.mxu0 0.0
      %563 = vmatprep.subr.mxu0 0.0
      %564 = vmatpush1.msra.mxu0 0.0
      %565 = vmatprep.subr.mxu0 0.0
      %566 = vmatpush1.msra.mxu0 0.0
      %567 = vmatprep.subr.mxu0 0.0
      %568 = vmatpush1.msra.mxu0 0.0
      %569 = vmatprep.subr.mxu0 0.0
      %570 = vmatpush1.msra.mxu0 0.0
      %571 = vmatprep.subr.mxu0 0.0
      %572 = vmatpush1.msra.mxu0 0.0
      %573 = vmatprep.subr.mxu0 0.0
      %574 = vmatpush1.msra.mxu0 0.0
      %575 = vmatprep.mubr.f32.mxu0 0.0
      %576 = vmatmul.mubr.f32.gmra.mrb[0].mxu0 %v503
      %v577 = vpop.f32.mrb[0].mxu0
      %v578 = vadd.f32 %v500, %v577
      %v579 = vpop.f32.mrb[0].mxu0
      %v580 = vadd.f32 %v500, %v579
      %581 = vdwg.mxu0
      %v582 = vadd.f32 %v578, %v214
      %v583 = vadd.f32 %v580, %v216
      %v584 = vmax.f32 %v582, 0.0
      %v585 = vmax.f32 %v583, 0.0
      %v588 = vcombine.low %v584, %v585
      %590 = vst [vmem:[%s197] sm:$0xff] %v588
      %p591 = scmp.lt.s32.totalorder %s15, 1
      %s592 = scalar_select %p591, %s15, 1
      %s593 = smul.addr %s592, 2
      %s594 = smul.addr %s593, 4
      %s595 = scalar_lea.vmem %s4, %s594
      // Predicated region
      $region37: #{residual_conv_block.1} parent=35 // pred_check
        %p596 = pneg %p122
      $region38: #{residual_conv_block.1} parent=35 // pred_check_branch
        %598 = sbr.rel (%p596) target = $region40
      $region39: #{residual_conv_block.1} parent=35 // pred_region
        _
      $region40: #{residual_conv_block.1} parent=35 // pred_fallthru
        _
    $region36: #{residual_conv_block.1} parent=5 // pred_fallthru
      _
    %p599 = scmp.le.s32.totalorder 2, %s10
    // Predicated region
    $region41: #{residual_conv_block.1} parent=5 // pred_check
      %p600 = pneg %p599
    $region42: #{residual_conv_block.1} parent=5 // pred_check_branch
      %602 = sbr.rel (%p600) target = $region44
    $region43: #{residual_conv_block.1} parent=5 // pred_region
      %s603 = ssub.s32 %s10, 2
      // Predicated region
      $region45: #{residual_conv_block.1} parent=43 // pred_check
        %p604 = pneg %p128
      $region46: #{residual_conv_block.1} parent=43 // pred_check_branch
        %606 = sbr.rel (%p604) target = $region48
      $region47: #{residual_conv_block.1} parent=43 // pred_region
        %p607 = scmp.lt.s32.totalorder %s16, 1
        %s608 = scalar_select %p607, %s16, 1
        %s609 = smul.addr %s608, 2
        %s610 = smul.addr %s609, 4
        %s611 = scalar_lea.vmem %s4, %s610
      $region48: #{residual_conv_block.1} parent=43 // pred_fallthru
        _
    $region44: #{residual_conv_block.1} parent=5 // pred_fallthru
      _
  $region6: #{residual_conv_block.1} parent=0 // loop_footer
    %s14 = sadd.s32 1, %s10
  $region7: #{residual_conv_block.1} parent=0 // loop_footer_branch
    %9 = sbr.rel target = $region3
  $region8: #{residual_conv_block.1} parent=0 // loop_exit
    _

</llo_original>
